<compile_context>
chip_gen: v7x
topology: tpu7x:2x2x1
jax: 0.10.0
libtpu: 0.0.40
codegen_flags: <defaults>
</compile_context>

<pallas_src>
import functools
import math

import jax
import jax.numpy as jnp
from jax import lax
from jax.experimental import pallas as pl
from jax.experimental.pallas import tpu as pltpu


LANE = 128
SUBLANE = 8


def _round_up(x, m):
    return ((x + m - 1) // m) * m


def _physical_vmem_bytes():
    try:
        return int(pltpu.get_tpu_info().vmem_capacity_bytes)
    except Exception:
        return 64 << 20  # conservative default (v7x per-TC VMEM)


# ----------------------------- Fused Pallas kernel -------------------------------

def _fused_mlp_kernel(*refs, activation, num_hidden, compute_dtype, fused_gather):
    """Per row-tile: gather (optional) + full MLP, all weights VMEM-resident."""
    it = iter(refs)
    if fused_gather:
        src_ref, dst_ref, x_ref = next(it), next(it), next(it)
    else:
        xs_ref, xd_ref = next(it), next(it)
    w1a_ref, w1b_ref, b1_ref = next(it), next(it), next(it)
    if num_hidden:
        wh_ref, bh_ref = next(it), next(it)
    wc_ref, bc_ref = next(it), next(it)
    out_ref, h_ref = next(it), next(it)

    def act(y):
        if activation == "relu":
            return jnp.maximum(y, 0.0)
        if activation == "tanh":
            return jnp.tanh(y)
        return y

    cd = compute_dtype

    if fused_gather:
        # Gather x[src] / x[dst] with one-hot selection matmuls (MXU); x is
        # VMEM-resident so the gather never produces HBM traffic.
        x_full = x_ref[...]                                     # [N_pad, F_pad] (cd)
        n_pad = x_full.shape[0]
        t_rows = src_ref.shape[0]
        node_ids = lax.broadcasted_iota(jnp.int32, (t_rows, n_pad), 1)
        src_oh = (node_ids == src_ref[...]).astype(cd)          # [T, N_pad]
        dst_oh = (node_ids == dst_ref[...]).astype(cd)
        xs = jnp.dot(src_oh, x_full, preferred_element_type=jnp.float32).astype(cd)
        xd = jnp.dot(dst_oh, x_full, preferred_element_type=jnp.float32).astype(cd)
    else:
        xs = xs_ref[...]                                        # already compute dtype
        xd = xd_ref[...]

    # Layer 1: cat(xs, xd) @ W1 + b1  ==  xs @ W1_top + xd @ W1_bottom + b1
    h = jnp.dot(xs, w1a_ref[...], preferred_element_type=jnp.float32)
    h = h + jnp.dot(xd, w1b_ref[...], preferred_element_type=jnp.float32)
    h = act(h + b1_ref[...])

    if num_hidden:
        if num_hidden <= 3:
            # Short stacks: static unroll (LLO scheduler visibility).
            for l in range(num_hidden):
                h = act(jnp.dot(h.astype(cd), wh_ref[l],
                                preferred_element_type=jnp.float32) + bh_ref[l])
        else:
            # Deep stacks: fori_loop bounds live ranges (avoids vreg blowup/spills).
            def body(l, hh):
                return act(jnp.dot(hh.astype(cd), wh_ref[l],
                                   preferred_element_type=jnp.float32) + bh_ref[l])
            h = lax.fori_loop(0, num_hidden, body, h)

    # Dropout: inference mode (training=False) -> identity.
    # TODO(synk): training-mode dropout (pltpu.prng_random_bits mask) not emitted.
    h_ref[...] = h.astype(h_ref.dtype)

    out = jnp.dot(h.astype(cd), wc_ref[...],
                  preferred_element_type=jnp.float32) + bc_ref[...]
    out_ref[...] = out.astype(out_ref.dtype)


def fused_linear_nn(params, x, edge_index, *, activation="relu",
                    compute_dtype=jnp.float32, row_tile=512):
    """out, h = LinearNN MLP over edges; gather + concat + MLP fused in one kernel."""
    N, F_in = x.shape
    E = int(edge_index.shape[1])
    w1, b1 = params["l1"]
    assert w1.shape[0] == 2 * F_in
    D = w1.shape[1]
    wc, bc = params["classifier"]
    C = wc.shape[1]
    L = len(params["lin_list"])
    out_dtype = x.dtype
    cd = compute_dtype
    cd_bytes = jnp.dtype(cd).itemsize
    f32 = jnp.float32

    vmem_cap = _physical_vmem_bytes()

    # Fuse the edge gather only if x fits comfortably in VMEM (single buffer).
    # TODO(synk): stream x (row-wise DMA gather) for graphs too large for VMEM;
    # until then the fallback gathers in the wrapper (previous behavior).
    n_pad = _round_up(N, LANE)
    fused_gather = (n_pad * _round_up(F_in, LANE) * cd_bytes) <= vmem_cap // 8

    F_pad = _round_up(F_in, LANE if fused_gather else SUBLANE)
    D_pad = _round_up(D, LANE)
    C_pad = _round_up(C, LANE)

    # Row tiling: large tiles amortize the ~0.35us/grid-step overhead; when there
    # is enough work keep >=2 tiles so the "parallel" axis spans v7x's 2 TCs.
    e_rows = _round_up(max(E, 1), SUBLANE)
    row_tile = min(row_tile, e_rows)
    if row_tile >= e_rows and e_rows >= 64:
        row_tile = _round_up(-(-e_rows // 2), SUBLANE)
    E_pad = _round_up(e_rows, row_tile)
    n_tiles = E_pad // row_tile

    def pad2(a, r, c, dt):
        return jnp.zeros((r, c), dt).at[:a.shape[0], :a.shape[1]].set(a.astype(dt))

    # Weights pre-padded & pre-cast to the MXU compute dtype (no in-kernel converts);
    # biases stay f32 (added to f32 accumulators).
    w1a = pad2(w1[:F_in], F_pad, D_pad, cd)          # top half of l1 weight
    w1b = pad2(w1[F_in:], F_pad, D_pad, cd)          # bottom half of l1 weight
    b1p = pad2(b1.reshape(1, -1), 1, D_pad, f32)
    wcp = pad2(wc, D_pad, C_pad, cd)
    bcp = pad2(bc.reshape(1, -1), 1, C_pad, f32)

    # Constant-index (resident) blocks: single-buffered.
    resident = dict(pipeline_mode=pl.Buffered(1)) if hasattr(pl, "Buffered") else {}

    operands, in_specs = [], []
    x_vmem = 0
    if fused_gather:
        x_p = pad2(x, n_pad, F_pad, cd)
        src_p = jnp.zeros((E_pad, 1), jnp.int32).at[:E, 0].set(edge_index[0].astype(jnp.int32))
        dst_p = jnp.zeros((E_pad, 1), jnp.int32).at[:E, 0].set(edge_index[1].astype(jnp.int32))
        operands += [src_p, dst_p, x_p]
        in_specs += [
            pl.BlockSpec((row_tile, 1), lambda i: (i, 0)),                 # src ids
            pl.BlockSpec((row_tile, 1), lambda i: (i, 0)),                 # dst ids
            pl.BlockSpec((n_pad, F_pad), lambda i: (0, 0), **resident),    # x (resident)
        ]
        x_vmem = x_p.size * cd_bytes
        tile_in_bytes = 2 * row_tile * 4
    else:
        xs_p = jnp.zeros((E_pad, F_pad), cd).at[:E, :F_in].set(x[edge_index[0]].astype(cd))
        xd_p = jnp.zeros((E_pad, F_pad), cd).at[:E, :F_in].set(x[edge_index[1]].astype(cd))
        operands += [xs_p, xd_p]
        in_specs += [
            pl.BlockSpec((row_tile, F_pad), lambda i: (i, 0)),
            pl.BlockSpec((row_tile, F_pad), lambda i: (i, 0)),
        ]
        tile_in_bytes = 2 * row_tile * F_pad * cd_bytes

    operands += [w1a, w1b, b1p]
    in_specs += [
        pl.BlockSpec((F_pad, D_pad), lambda i: (0, 0), **resident),
        pl.BlockSpec((F_pad, D_pad), lambda i: (0, 0), **resident),
        pl.BlockSpec((1, D_pad), lambda i: (0, 0), **resident),
    ]

    weight_vmem = (w1a.size + w1b.size + wcp.size) * cd_bytes + (b1p.size + bcp.size) * 4
    if L:  # skip dummy slabs entirely when there are no hidden layers
        wh = jnp.zeros((L, D_pad, D_pad), cd)
        bh = jnp.zeros((L, 1, D_pad), f32)
        for l, (w, b) in enumerate(params["lin_list"]):
            wh = wh.at[l, :D, :D].set(w.astype(cd))
            bh = bh.at[l, 0, :D].set(b.astype(f32))
        operands += [wh, bh]
        in_specs += [
            pl.BlockSpec((L, D_pad, D_pad), lambda i: (0, 0, 0), **resident),
            pl.BlockSpec((L, 1, D_pad), lambda i: (0, 0, 0), **resident),
        ]
        weight_vmem += wh.size * cd_bytes + bh.size * 4

    operands += [wcp, bcp]
    in_specs += [
        pl.BlockSpec((D_pad, C_pad), lambda i: (0, 0), **resident),
        pl.BlockSpec((1, C_pad), lambda i: (0, 0), **resident),
    ]

    out_bytes = jnp.dtype(out_dtype).itemsize
    tile_out_bytes = row_tile * (C_pad + D_pad) * out_bytes
    scratch_slack = 4 * row_tile * (D_pad + (n_pad if fused_gather else F_pad)) * 4
    needed = weight_vmem + x_vmem + 2 * (tile_in_bytes + tile_out_bytes) + scratch_slack
    vmem_limit = int(min(0.9 * vmem_cap, max(2 * needed, 32 << 20)))

    flops = 2 * E_pad * (2 * F_pad * D_pad + L * D_pad * D_pad + D_pad * C_pad)
    if fused_gather:
        flops += 2 * 2 * E_pad * n_pad * F_pad
    transc = E_pad * D_pad * (1 + L) if activation == "tanh" else 0
    bytes_acc = int(sum(int(o.size) * o.dtype.itemsize for o in operands)
                    + E_pad * (C_pad + D_pad) * out_bytes)

    kernel = functools.partial(_fused_mlp_kernel, activation=activation,
                               num_hidden=L, compute_dtype=cd,
                               fused_gather=fused_gather)

    out_pad, h_pad = pl.pallas_call(
        kernel,
        out_shape=(jax.ShapeDtypeStruct((E_pad, C_pad), out_dtype),
                   jax.ShapeDtypeStruct((E_pad, D_pad), out_dtype)),
        grid_spec=pltpu.PrefetchScalarGridSpec(
            num_scalar_prefetch=0,
            grid=(n_tiles,),
            in_specs=in_specs,
            out_specs=[
                pl.BlockSpec((row_tile, C_pad), lambda i: (i, 0)),   # out (lane-dense)
                pl.BlockSpec((row_tile, D_pad), lambda i: (i, 0)),   # h   (lane-dense)
            ],
        ),
        compiler_params=pltpu.CompilerParams(
            dimension_semantics=("parallel",),
            vmem_limit_bytes=vmem_limit),
        cost_estimate=pl.CostEstimate(flops=int(flops), transcendentals=int(transc),
                                      bytes_accessed=int(bytes_acc)),
    )(*operands)

    return out_pad[:E, :C], h_pad[:E, :D]


# ----------------------------- Model wrapper -------------------------------

def init_linear_params(key, in_dim, out_dim, dtype=jnp.float32):
    """Mimics torch.nn.Linear's uniform(-1/sqrt(in), 1/sqrt(in)) init."""
    kw, kb = jax.random.split(key)
    bound = 1.0 / math.sqrt(in_dim)
    # Stored as [in, out] (transposed vs PyTorch's [out, in]) for x @ W.
    w = jax.random.uniform(kw, (in_dim, out_dim), dtype, minval=-bound, maxval=bound)
    b = jax.random.uniform(kb, (out_dim,), dtype, minval=-bound, maxval=bound)
    return w, b


def init_linear_nn(key, num_features, num_classes, dim, l_depth):
    dim2 = max(1, math.ceil(dim / 2.0))  # defined in __init__ but unused in forward
    dim4 = max(1, math.ceil(dim / 4.0))  # defined in __init__ but unused in forward
    del dim2, dim4
    keys = jax.random.split(key, l_depth + 1)
    return {
        "l1": init_linear_params(keys[0], num_features * 2, dim),
        "lin_list": [init_linear_params(keys[1 + i], dim, dim)
                     for i in range(l_depth - 1)],
        "classifier": init_linear_params(keys[l_depth], dim, num_classes),
    }


def linear_nn_forward(params, x, edge_index, batch, *, activation="relu",
                      compute_dtype=jnp.float32):
    del batch  # unused by the forward pass (kept for signature parity)
    return fused_linear_nn(params, x, edge_index, activation=activation,
                           compute_dtype=compute_dtype)


def _reference_forward(params, x, edge_index, activation):
    """Plain-JAX reference for correctness checking."""
    def act(y):
        if activation == "relu":
            return jnp.maximum(y, 0.0)
        if activation == "tanh":
            return jnp.tanh(y)
        return y
    e = jnp.concatenate((x[edge_index[0]], x[edge_index[1]]), axis=1)
    w1, b1 = params["l1"]
    h = act(e @ w1 + b1)
    for w, b in params["lin_list"]:
        h = act(h @ w + b)
    wc, bc = params["classifier"]
    return h @ wc + bc, h


# ----------------------------------- Main -----------------------------------

if __name__ == "__main__":
    # Small synthetic "dataset": 8 nodes, 4 features/node, 3 classes, 16 edges.
    num_nodes = 8
    num_features = 4
    num_classes = 3
    num_edges = 16
    m_params = {"dim": 32, "dropout": 0.1, "l_depth": 3, "activation": "relu"}

    key = jax.random.PRNGKey(0)
    k_x, k_e, k_p = jax.random.split(key, 3)

    x = jax.random.normal(k_x, (num_nodes, num_features), jnp.float32)
    edge_index = jax.random.randint(k_e, (2, num_edges), 0, num_nodes, jnp.int32)
    batch = jnp.zeros((num_nodes,), jnp.int32)  # unused by forward, kept for parity

    params = init_linear_nn(k_p, num_features, num_classes,
                            m_params["dim"], m_params["l_depth"])

    out, h = linear_nn_forward(params, x, edge_index, batch,
                               activation=m_params["activation"])
    jax.block_until_ready((out, h))

    assert out.shape == (num_edges, num_classes)
    assert h.shape == (num_edges, m_params["dim"])

    # Numerical check against a plain-JAX reference (f32 compute -> tight tolerance).
    out_ref, h_ref = _reference_forward(params, x, edge_index, m_params["activation"])
    assert jnp.allclose(out, out_ref, atol=1e-4, rtol=1e-4)
    assert jnp.allclose(h, h_ref, atol=1e-4, rtol=1e-4)

    print("KERNEL_OK")
</pallas_src>

<mosaic_0001>
module attributes {stable_mosaic.version = 11 : i64} {
  func.func @_fused_mlp_kernel(%arg0: i32, %arg1: memref<16x1xi32, #tpu.memory_space<vmem>>, %arg2: memref<16x1xi32, #tpu.memory_space<vmem>>, %arg3: memref<128x128xf32, #tpu.memory_space<vmem>>, %arg4: memref<128x128xf32, #tpu.memory_space<vmem>>, %arg5: memref<128x128xf32, #tpu.memory_space<vmem>>, %arg6: memref<1x128xf32, #tpu.memory_space<vmem>>, %arg7: memref<2x128x128xf32, #tpu.memory_space<vmem>>, %arg8: memref<2x1x128xf32, #tpu.memory_space<vmem>>, %arg9: memref<128x128xf32, #tpu.memory_space<vmem>>, %arg10: memref<1x128xf32, #tpu.memory_space<vmem>>, %arg11: memref<16x128xf32, #tpu.memory_space<vmem>>, %arg12: memref<16x128xf32, #tpu.memory_space<vmem>>) attributes {dimension_semantics = [#tpu.dimension_semantics<parallel>], iteration_bounds = array<i64: 1>, scalar_prefetch = 0 : i64, scratch_operands = 0 : i64, tpu.core_type = #tpu.core_type<tc>, window_params = [{transform_indices = @transform_0, window_bounds = array<i64: 16, 1>}, {transform_indices = @transform_1, window_bounds = array<i64: 16, 1>}, {pipeline_mode = #tpu.pipeline_mode<synchronous>, transform_indices = @transform_2, window_bounds = array<i64: 128, 128>}, {pipeline_mode = #tpu.pipeline_mode<synchronous>, transform_indices = @transform_3, window_bounds = array<i64: 128, 128>}, {pipeline_mode = #tpu.pipeline_mode<synchronous>, transform_indices = @transform_4, window_bounds = array<i64: 128, 128>}, {pipeline_mode = #tpu.pipeline_mode<synchronous>, transform_indices = @transform_5, window_bounds = array<i64: 1, 128>}, {pipeline_mode = #tpu.pipeline_mode<synchronous>, transform_indices = @transform_6, window_bounds = array<i64: 2, 128, 128>}, {pipeline_mode = #tpu.pipeline_mode<synchronous>, transform_indices = @transform_7, window_bounds = array<i64: 2, 1, 128>}, {pipeline_mode = #tpu.pipeline_mode<synchronous>, transform_indices = @transform_8, window_bounds = array<i64: 128, 128>}, {pipeline_mode = #tpu.pipeline_mode<synchronous>, transform_indices = @transform_9, window_bounds = array<i64: 1, 128>}, {transform_indices = @transform_10, window_bounds = array<i64: 16, 128>}, {transform_indices = @transform_11, window_bounds = array<i64: 16, 128>}]} {
    %c0 = arith.constant 0 : index
    %c0_0 = arith.constant 0 : index
    %0 = vector.load %arg3[%c0, %c0_0] : memref<128x128xf32, #tpu.memory_space<vmem>>, vector<128x128xf32>
    %1 = tpu.iota {dimensions = array<i32: 1>} : vector<16x128xi32>
    %c0_1 = arith.constant 0 : index
    %c0_2 = arith.constant 0 : index
    %2 = vector.load %arg1[%c0_1, %c0_2] : memref<16x1xi32, #tpu.memory_space<vmem>>, vector<16x1xi32>
    %3 = vector.broadcast %2 : vector<16x1xi32> to vector<16x128xi32>
    %4 = arith.cmpi eq, %1, %3 : vector<16x128xi32>
    %5 = arith.extui %4 : vector<16x128xi1> to vector<16x128xi32>
    %6 = arith.sitofp %5 : vector<16x128xi32> to vector<16x128xf32>
    %c0_3 = arith.constant 0 : index
    %c0_4 = arith.constant 0 : index
    %7 = vector.load %arg2[%c0_3, %c0_4] : memref<16x1xi32, #tpu.memory_space<vmem>>, vector<16x1xi32>
    %8 = vector.broadcast %7 : vector<16x1xi32> to vector<16x128xi32>
    %9 = arith.cmpi eq, %1, %8 : vector<16x128xi32>
    %10 = arith.extui %9 : vector<16x128xi1> to vector<16x128xi32>
    %11 = arith.sitofp %10 : vector<16x128xi32> to vector<16x128xf32>
    %cst = arith.constant dense<0.000000e+00> : vector<16x128xf32>
    %12 = tpu.matmul %6, %0, %cst {dimension_numbers = #tpu.dot_dimension_numbers<[1], [0], [0], [1], [0, 0, 1, 1], [], []>} : vector<16x128xf32>, vector<128x128xf32>, vector<16x128xf32> -> vector<16x128xf32>
    %cst_5 = arith.constant dense<0.000000e+00> : vector<16x128xf32>
    %13 = tpu.matmul %11, %0, %cst_5 {dimension_numbers = #tpu.dot_dimension_numbers<[1], [0], [0], [1], [0, 0, 1, 1], [], []>} : vector<16x128xf32>, vector<128x128xf32>, vector<16x128xf32> -> vector<16x128xf32>
    %c0_6 = arith.constant 0 : index
    %c0_7 = arith.constant 0 : index
    %14 = vector.load %arg4[%c0_6, %c0_7] : memref<128x128xf32, #tpu.memory_space<vmem>>, vector<128x128xf32>
    %cst_8 = arith.constant dense<0.000000e+00> : vector<16x128xf32>
    %15 = tpu.matmul %12, %14, %cst_8 {dimension_numbers = #tpu.dot_dimension_numbers<[1], [0], [0], [1], [0, 0, 1, 1], [], []>} : vector<16x128xf32>, vector<128x128xf32>, vector<16x128xf32> -> vector<16x128xf32>
    %c0_9 = arith.constant 0 : index
    %c0_10 = arith.constant 0 : index
    %16 = vector.load %arg5[%c0_9, %c0_10] : memref<128x128xf32, #tpu.memory_space<vmem>>, vector<128x128xf32>
    %cst_11 = arith.constant dense<0.000000e+00> : vector<16x128xf32>
    %17 = tpu.matmul %13, %16, %cst_11 {dimension_numbers = #tpu.dot_dimension_numbers<[1], [0], [0], [1], [0, 0, 1, 1], [], []>} : vector<16x128xf32>, vector<128x128xf32>, vector<16x128xf32> -> vector<16x128xf32>
    %18 = arith.addf %15, %17 : vector<16x128xf32>
    %c0_12 = arith.constant 0 : index
    %c0_13 = arith.constant 0 : index
    %19 = vector.load %arg6[%c0_12, %c0_13] : memref<1x128xf32, #tpu.memory_space<vmem>>, vector<1x128xf32>
    %20 = vector.broadcast %19 : vector<1x128xf32> to vector<16x128xf32>
    %21 = arith.addf %18, %20 : vector<16x128xf32>
    %cst_14 = arith.constant 0.000000e+00 : f32
    %22 = vector.broadcast %cst_14 : f32 to vector<16x128xf32>
    %23 = arith.maximumf %21, %22 : vector<16x128xf32>
    %c0_15 = arith.constant 0 : index
    %c0_16 = arith.constant 0 : index
    %c0_17 = arith.constant 0 : index
    %24 = vector.load %arg7[%c0_15, %c0_16, %c0_17] : memref<2x128x128xf32, #tpu.memory_space<vmem>>, vector<1x128x128xf32>
    %25 = vector.shape_cast %24 : vector<1x128x128xf32> to vector<128x128xf32>
    %cst_18 = arith.constant dense<0.000000e+00> : vector<16x128xf32>
    %26 = tpu.matmul %23, %25, %cst_18 {dimension_numbers = #tpu.dot_dimension_numbers<[1], [0], [0], [1], [0, 0, 1, 1], [], []>} : vector<16x128xf32>, vector<128x128xf32>, vector<16x128xf32> -> vector<16x128xf32>
    %c0_19 = arith.constant 0 : index
    %c0_20 = arith.constant 0 : index
    %c0_21 = arith.constant 0 : index
    %27 = vector.load %arg8[%c0_19, %c0_20, %c0_21] : memref<2x1x128xf32, #tpu.memory_space<vmem>>, vector<1x1x128xf32>
    %28 = vector.shape_cast %27 : vector<1x1x128xf32> to vector<1x128xf32>
    %29 = vector.broadcast %28 : vector<1x128xf32> to vector<16x128xf32>
    %30 = arith.addf %26, %29 : vector<16x128xf32>
    %cst_22 = arith.constant 0.000000e+00 : f32
    %31 = vector.broadcast %cst_22 : f32 to vector<16x128xf32>
    %32 = arith.maximumf %30, %31 : vector<16x128xf32>
    %c1 = arith.constant 1 : index
    %c0_23 = arith.constant 0 : index
    %c0_24 = arith.constant 0 : index
    %33 = vector.load %arg7[%c1, %c0_23, %c0_24] : memref<2x128x128xf32, #tpu.memory_space<vmem>>, vector<1x128x128xf32>
    %34 = vector.shape_cast %33 : vector<1x128x128xf32> to vector<128x128xf32>
    %cst_25 = arith.constant dense<0.000000e+00> : vector<16x128xf32>
    %35 = tpu.matmul %32, %34, %cst_25 {dimension_numbers = #tpu.dot_dimension_numbers<[1], [0], [0], [1], [0, 0, 1, 1], [], []>} : vector<16x128xf32>, vector<128x128xf32>, vector<16x128xf32> -> vector<16x128xf32>
    %c1_26 = arith.constant 1 : index
    %c0_27 = arith.constant 0 : index
    %c0_28 = arith.constant 0 : index
    %36 = vector.load %arg8[%c1_26, %c0_27, %c0_28] : memref<2x1x128xf32, #tpu.memory_space<vmem>>, vector<1x1x128xf32>
    %37 = vector.shape_cast %36 : vector<1x1x128xf32> to vector<1x128xf32>
    %38 = vector.broadcast %37 : vector<1x128xf32> to vector<16x128xf32>
    %39 = arith.addf %35, %38 : vector<16x128xf32>
    %cst_29 = arith.constant 0.000000e+00 : f32
    %40 = vector.broadcast %cst_29 : f32 to vector<16x128xf32>
    %41 = arith.maximumf %39, %40 : vector<16x128xf32>
    %c0_30 = arith.constant 0 : index
    %c0_31 = arith.constant 0 : index
    %42 = vector.load %arg12[%c0_30, %c0_31] : memref<16x128xf32, #tpu.memory_space<vmem>>, vector<16x128xf32>
    tpu.vector_store %arg12[%c0_30, %c0_31], %41 {strides = array<i32>} : memref<16x128xf32, #tpu.memory_space<vmem>>, vector<16x128xf32>,
    %c0_32 = arith.constant 0 : index
    %c0_33 = arith.constant 0 : index
    %43 = vector.load %arg9[%c0_32, %c0_33] : memref<128x128xf32, #tpu.memory_space<vmem>>, vector<128x128xf32>
    %cst_34 = arith.constant dense<0.000000e+00> : vector<16x128xf32>
    %44 = tpu.matmul %41, %43, %cst_34 {dimension_numbers = #tpu.dot_dimension_numbers<[1], [0], [0], [1], [0, 0, 1, 1], [], []>} : vector<16x128xf32>, vector<128x128xf32>, vector<16x128xf32> -> vector<16x128xf32>
    %c0_35 = arith.constant 0 : index
    %c0_36 = arith.constant 0 : index
    %45 = vector.load %arg10[%c0_35, %c0_36] : memref<1x128xf32, #tpu.memory_space<vmem>>, vector<1x128xf32>
    %46 = vector.broadcast %45 : vector<1x128xf32> to vector<16x128xf32>
    %47 = arith.addf %44, %46 : vector<16x128xf32>
    %c0_37 = arith.constant 0 : index
    %c0_38 = arith.constant 0 : index
    %48 = vector.load %arg11[%c0_37, %c0_38] : memref<16x128xf32, #tpu.memory_space<vmem>>, vector<16x128xf32>
    tpu.vector_store %arg11[%c0_37, %c0_38], %47 {strides = array<i32>} : memref<16x128xf32, #tpu.memory_space<vmem>>, vector<16x128xf32>,
    return
  }
  func.func @transform_0(%arg0: i32) -> (i32, i32) {
    %c0_i32 = arith.constant 0 : i32
    %c0_i32_0 = arith.constant 0 : i32
    return %arg0, %c0_i32 : i32, i32
  }
  func.func @transform_1(%arg0: i32) -> (i32, i32) {
    %c0_i32 = arith.constant 0 : i32
    %c0_i32_0 = arith.constant 0 : i32
    return %arg0, %c0_i32 : i32, i32
  }
  func.func @transform_2(%arg0: i32) -> (i32, i32) {
    %c0_i32 = arith.constant 0 : i32
    %c0_i32_0 = arith.constant 0 : i32
    %c0_i32_1 = arith.constant 0 : i32
    return %c0_i32, %c0_i32_0 : i32, i32
  }
  func.func @transform_3(%arg0: i32) -> (i32, i32) {
    %c0_i32 = arith.constant 0 : i32
    %c0_i32_0 = arith.constant 0 : i32
    %c0_i32_1 = arith.constant 0 : i32
    return %c0_i32, %c0_i32_0 : i32, i32
  }
  func.func @transform_4(%arg0: i32) -> (i32, i32) {
    %c0_i32 = arith.constant 0 : i32
    %c0_i32_0 = arith.constant 0 : i32
    %c0_i32_1 = arith.constant 0 : i32
    return %c0_i32, %c0_i32_0 : i32, i32
  }
  func.func @transform_5(%arg0: i32) -> (i32, i32) {
    %c0_i32 = arith.constant 0 : i32
    %c0_i32_0 = arith.constant 0 : i32
    %c0_i32_1 = arith.constant 0 : i32
    return %c0_i32, %c0_i32_0 : i32, i32
  }
  func.func @transform_6(%arg0: i32) -> (i32, i32, i32) {
    %c0_i32 = arith.constant 0 : i32
    %c0_i32_0 = arith.constant 0 : i32
    %c0_i32_1 = arith.constant 0 : i32
    %c0_i32_2 = arith.constant 0 : i32
    return %c0_i32, %c0_i32_0, %c0_i32_1 : i32, i32, i32
  }
  func.func @transform_7(%arg0: i32) -> (i32, i32, i32) {
    %c0_i32 = arith.constant 0 : i32
    %c0_i32_0 = arith.constant 0 : i32
    %c0_i32_1 = arith.constant 0 : i32
    %c0_i32_2 = arith.constant 0 : i32
    return %c0_i32, %c0_i32_0, %c0_i32_1 : i32, i32, i32
  }
  func.func @transform_8(%arg0: i32) -> (i32, i32) {
    %c0_i32 = arith.constant 0 : i32
    %c0_i32_0 = arith.constant 0 : i32
    %c0_i32_1 = arith.constant 0 : i32
    return %c0_i32, %c0_i32_0 : i32, i32
  }
  func.func @transform_9(%arg0: i32) -> (i32, i32) {
    %c0_i32 = arith.constant 0 : i32
    %c0_i32_0 = arith.constant 0 : i32
    %c0_i32_1 = arith.constant 0 : i32
    return %c0_i32, %c0_i32_0 : i32, i32
  }
  func.func @transform_10(%arg0: i32) -> (i32, i32) {
    %c0_i32 = arith.constant 0 : i32
    %c0_i32_0 = arith.constant 0 : i32
    return %arg0, %c0_i32 : i32, i32
  }
  func.func @transform_11(%arg0: i32) -> (i32, i32) {
    %c0_i32 = arith.constant 0 : i32
    %c0_i32_0 = arith.constant 0 : i32
    return %arg0, %c0_i32 : i32, i32
  }
}

</mosaic_0001>

<llo_original>
// kernel: tpu_custom_call.1
$region0: #{tpu_custom_call.1}
  #allocation0 [shape = 'u32[]', space=smem, size = 0x4, offset = 0x4, fixed_abs, tag = 'smem constant byte address 0x4 - core index']
  #allocation1 [shape = 'u32[144,128]{1,0:T(1,128)}', space=vmem, size = 0x12000, scoped, tag = 'internal scratch']
  %s0 = inlined_call_operand.vmem [shape: s32[16,1], index: 0, kind: input, shape index: {}]
  %s1 = inlined_call_operand.vmem [shape: s32[16,1], index: 1, kind: input, shape index: {}]
  %s2 = inlined_call_operand.hbm [shape: f32[128,128], index: 2, kind: input, shape index: {}]
  %s3 = inlined_call_operand.hbm [shape: f32[128,128], index: 3, kind: input, shape index: {}]
  %s4 = inlined_call_operand.hbm [shape: f32[128,128], index: 4, kind: input, shape index: {}]
  %s5 = inlined_call_operand.vmem [shape: f32[1,128], index: 5, kind: input, shape index: {}]
  %s6 = inlined_call_operand.hbm [shape: f32[2,128,128], index: 6, kind: input, shape index: {}]
  %s7 = inlined_call_operand.vmem [shape: f32[2,1,128], index: 7, kind: input, shape index: {}]
  %s8 = inlined_call_operand.hbm [shape: f32[128,128], index: 8, kind: input, shape index: {}]
  %s9 = inlined_call_operand.vmem [shape: f32[1,128], index: 9, kind: input, shape index: {}]
  %s10 = inlined_call_operand.hbm [shape: f32[16,128], index: 10, kind: output, shape index: {0}]
  %s11 = inlined_call_operand.hbm [shape: f32[16,128], index: 11, kind: output, shape index: {1}]
  %12 = xla_tuple %s10, %s11
  %s13 = sld [smem:[#allocation0]]
  $region78: #{tpu_custom_call.1} parent=0
    _
  %s15 = ssub.s32 1, %s13
  %s16 = scalar_select 0, %s15, %s13
  $region1: #{tpu_custom_call.1} parent=0
    #allocation2 [shape = 'u8[65536]{0}', space=vmem, size = 0x10000, scoped, tag = 'input window, operand 2, single buffered']
    #allocation3 [shape = 's32[1]{0}', space=sflag, size = 0x4, scoped, tag = 'scoped memory for tpu_custom_call.1']
    #allocation4 [shape = 's32[1]{0}', space=sflag, size = 0x4, scoped, tag = 'scoped memory for tpu_custom_call.1']
    #allocation5 [shape = 'u8[65536]{0}', space=vmem, size = 0x10000, scoped, tag = 'input window, operand 3, single buffered']
    #allocation6 [shape = 's32[1]{0}', space=sflag, size = 0x4, scoped, tag = 'scoped memory for tpu_custom_call.1']
    #allocation7 [shape = 'u8[65536]{0}', space=vmem, size = 0x10000, scoped, tag = 'input window, operand 4, single buffered']
    #allocation8 [shape = 'u8[131072]{0}', space=vmem, size = 0x20000, scoped, tag = 'input window, operand 6, single buffered']
    #allocation9 [shape = 's32[1]{0}', space=sflag, size = 0x4, scoped, tag = 'scoped memory for tpu_custom_call.1']
    #allocation10 [shape = 'u8[65536]{0}', space=vmem, size = 0x10000, scoped, tag = 'input window, operand 8, single buffered']
    #allocation11 [shape = 'u8[8192]{0}', space=vmem, size = 0x2000, scoped, tag = 'output window, operand 0, single buffered']
    #allocation12 [shape = 'u8[8192]{0}', space=vmem, size = 0x2000, scoped, tag = 'output window, operand 1, single buffered']
    #allocation13 [shape = 's32[1]{0}', space=sflag, size = 0x4, scoped, tag = 'scoped memory for tpu_custom_call.1']
    %17 = vsyncpa [#allocation3], 0
    %18 = vsyncpa [#allocation6], 0
    %19 = vsyncpa [#allocation9], 0
    %20 = vsyncpa [#allocation4], 0
    %21 = vsyncpa [#allocation13], 0
    // Predicated region
    $region2: #{tpu_custom_call.1} parent=1 // pred_check
      _
    $region3: #{tpu_custom_call.1} parent=1 // pred_check_branch
      %23 = sbr.rel (0) target = $region5
    $region4: #{tpu_custom_call.1} parent=1 // pred_region
      _
    $region5: #{tpu_custom_call.1} parent=1 // pred_fallthru
      _
    // Predicated region
    $region6: #{tpu_custom_call.1} parent=1 // pred_check
      _
    $region7: #{tpu_custom_call.1} parent=1 // pred_check_branch
      %25 = sbr.rel (0) target = $region9
    $region8: #{tpu_custom_call.1} parent=1 // pred_region
      _
    $region9: #{tpu_custom_call.1} parent=1 // pred_fallthru
      _
    // Predicated region
    $region10: #{tpu_custom_call.1} parent=1 // pred_check
      _
    $region11: #{tpu_custom_call.1} parent=1 // pred_check_branch
      %27 = sbr.rel (0) target = $region13
    $region12: #{tpu_custom_call.1} parent=1 // pred_region
      %s29 = ssub.s32 2048, 2048
      %30 = vsyncadd [#allocation3], %s29
      %s31 = sshll.u32 [#allocation2], 4
      %s32 = int_to_ptr.vmem [resolvable:$true] %s31
      %37 = dma.hbm_to_vmem [thread:$0]  %s2, 2048, %s32, [#allocation3], 128, 128, 8
    $region13: #{tpu_custom_call.1} parent=1 // pred_fallthru
      _
    // Predicated region
    $region14: #{tpu_custom_call.1} parent=1 // pred_check
      _
    $region15: #{tpu_custom_call.1} parent=1 // pred_check_branch
      %39 = sbr.rel (0) target = $region17
    $region16: #{tpu_custom_call.1} parent=1 // pred_region
      %s41 = ssub.s32 2048, 2048
      %42 = vsyncadd [#allocation6], %s41
      %s43 = sshll.u32 [#allocation5], 4
      %s44 = int_to_ptr.vmem [resolvable:$true] %s43
      %49 = dma.hbm_to_vmem [thread:$0]  %s3, 2048, %s44, [#allocation6], 128, 128, 8
    $region17: #{tpu_custom_call.1} parent=1 // pred_fallthru
      _
    // Predicated region
    $region18: #{tpu_custom_call.1} parent=1 // pred_check
      _
    $region19: #{tpu_custom_call.1} parent=1 // pred_check_branch
      %51 = sbr.rel (0) target = $region21
    $region20: #{tpu_custom_call.1} parent=1 // pred_region
      %s53 = ssub.s32 2048, 2048
      %54 = vsyncadd [#allocation6], %s53
      %s55 = sshll.u32 [#allocation7], 4
      %s56 = int_to_ptr.vmem [resolvable:$true] %s55
      %61 = dma.hbm_to_vmem [thread:$0]  %s4, 2048, %s56, [#allocation6], 128, 128, 8
    $region21: #{tpu_custom_call.1} parent=1 // pred_fallthru
      _
    // Predicated region
    $region22: #{tpu_custom_call.1} parent=1 // pred_check
      _
    $region23: #{tpu_custom_call.1} parent=1 // pred_check_branch
      %63 = sbr.rel (0) target = $region25
    $region24: #{tpu_custom_call.1} parent=1 // pred_region
      _
    $region25: #{tpu_custom_call.1} parent=1 // pred_fallthru
      _
    // Predicated region
    $region26: #{tpu_custom_call.1} parent=1 // pred_check
      _
    $region27: #{tpu_custom_call.1} parent=1 // pred_check_branch
      %65 = sbr.rel (0) target = $region29
    $region28: #{tpu_custom_call.1} parent=1 // pred_region
      %s67 = ssub.s32 4096, 4096
      %68 = vsyncadd [#allocation9], %s67
      %s69 = sshll.u32 [#allocation8], 4
      %s70 = int_to_ptr.vmem [resolvable:$true] %s69
      %75 = dma.hbm_to_vmem [thread:$0]  %s6, 4096, %s70, [#allocation9], 128, 128, 8
    $region29: #{tpu_custom_call.1} parent=1 // pred_fallthru
      _
    // Predicated region
    $region30: #{tpu_custom_call.1} parent=1 // pred_check
      _
    $region31: #{tpu_custom_call.1} parent=1 // pred_check_branch
      %77 = sbr.rel (0) target = $region33
    $region32: #{tpu_custom_call.1} parent=1 // pred_region
      _
    $region33: #{tpu_custom_call.1} parent=1 // pred_fallthru
      _
    // Predicated region
    $region34: #{tpu_custom_call.1} parent=1 // pred_check
      _
    $region35: #{tpu_custom_call.1} parent=1 // pred_check_branch
      %79 = sbr.rel (0) target = $region37
    $region36: #{tpu_custom_call.1} parent=1 // pred_region
      %s81 = ssub.s32 2048, 2048
      %82 = vsyncadd [#allocation9], %s81
      %s83 = sshll.u32 [#allocation10], 4
      %s84 = int_to_ptr.vmem [resolvable:$true] %s83
      %89 = dma.hbm_to_vmem [thread:$0]  %s8, 2048, %s84, [#allocation9], 128, 128, 8
    $region37: #{tpu_custom_call.1} parent=1 // pred_fallthru
      _
    // Predicated region
    $region38: #{tpu_custom_call.1} parent=1 // pred_check
      _
    $region39: #{tpu_custom_call.1} parent=1 // pred_check_branch
      %91 = sbr.rel (0) target = $region41
    $region40: #{tpu_custom_call.1} parent=1 // pred_region
      _
    $region41: #{tpu_custom_call.1} parent=1 // pred_fallthru
      _
    // Predicated region
    $region42: #{tpu_custom_call.1} parent=1 // pred_check
      _
    $region43: #{tpu_custom_call.1} parent=1 // pred_check_branch
      %93 = sbr.rel (0) target = $region45
    $region44: #{tpu_custom_call.1} parent=1 // pred_region
      %94 = dma.done [#allocation3], 2048
    $region45: #{tpu_custom_call.1} parent=1 // pred_fallthru
      _
    // Predicated region
    $region46: #{tpu_custom_call.1} parent=1 // pred_check
      _
    $region47: #{tpu_custom_call.1} parent=1 // pred_check_branch
      %96 = sbr.rel (0) target = $region49
    $region48: #{tpu_custom_call.1} parent=1 // pred_region
      %97 = dma.done [#allocation6], 2048
    $region49: #{tpu_custom_call.1} parent=1 // pred_fallthru
      _
    // Predicated region
    $region50: #{tpu_custom_call.1} parent=1 // pred_check
      _
    $region51: #{tpu_custom_call.1} parent=1 // pred_check_branch
      %99 = sbr.rel (0) target = $region53
    $region52: #{tpu_custom_call.1} parent=1 // pred_region
      %100 = dma.done [#allocation6], 2048
    $region53: #{tpu_custom_call.1} parent=1 // pred_fallthru
      _
    // Predicated region
    $region54: #{tpu_custom_call.1} parent=1 // pred_check
      _
    $region55: #{tpu_custom_call.1} parent=1 // pred_check_branch
      %102 = sbr.rel (0) target = $region57
    $region56: #{tpu_custom_call.1} parent=1 // pred_region
      %103 = dma.done [#allocation9], 4096
    $region57: #{tpu_custom_call.1} parent=1 // pred_fallthru
      _
    // Predicated region
    $region58: #{tpu_custom_call.1} parent=1 // pred_check
      _
    $region59: #{tpu_custom_call.1} parent=1 // pred_check_branch
      %105 = sbr.rel (0) target = $region61
    $region60: #{tpu_custom_call.1} parent=1 // pred_region
      %106 = dma.done [#allocation9], 2048
    $region61: #{tpu_custom_call.1} parent=1 // pred_fallthru
      _
    %v107 = vld [vmem:[#allocation2] sm:$0xff]
    %v108 = vld [vmem:[#allocation2 + $0x8] sm:$0xff]
    %v109 = vld [vmem:[#allocation2 + $0x10] sm:$0xff]
    %v110 = vld [vmem:[#allocation2 + $0x18] sm:$0xff]
    %v111 = vld [vmem:[#allocation2 + $0x20] sm:$0xff]
    %v112 = vld [vmem:[#allocation2 + $0x28] sm:$0xff]
    %v113 = vld [vmem:[#allocation2 + $0x30] sm:$0xff]
    %v114 = vld [vmem:[#allocation2 + $0x38] sm:$0xff]
    %v115 = vld [vmem:[#allocation2 + $0x40] sm:$0xff]
    %v116 = vld [vmem:[#allocation2 + $0x48] sm:$0xff]
    %v117 = vld [vmem:[#allocation2 + $0x50] sm:$0xff]
    %v118 = vld [vmem:[#allocation2 + $0x58] sm:$0xff]
    %v119 = vld [vmem:[#allocation2 + $0x60] sm:$0xff]
    %v120 = vld [vmem:[#allocation2 + $0x68] sm:$0xff]
    %v121 = vld [vmem:[#allocation2 + $0x70] sm:$0xff]
    %v122 = vld [vmem:[#allocation2 + $0x78] sm:$0xff]
    %v123 = vlaneseq
    %v124 = vand.u32 %v123, 127
    %v125 = vld [vmem:[%s0] sm:$0xff]
    %v126 = vld [vmem:[%s0 + $0x8] sm:$0xff]
    %127 = vset.pattern.permute.xlu0 0
    %128 = vperm.xlu0 %127, %v125
    %v129 = vpop.permute.xlu0 %128
    %130 = vset.pattern.permute.xlu0 0
    %131 = vperm.xlu0 %130, %v126
    %v132 = vpop.permute.xlu0 %131
    %vm133 = vcmp.eq.s32.totalorder %v124, %v129
    %vm134 = vcmp.eq.s32.totalorder %v124, %v132
    %v135 = vsel %vm133, 1, 0
    %v136 = vsel %vm134, 1, 0
    %v137 = vcvt.s32.f32 %v135
    %v138 = vcvt.s32.f32 %v136
    %v139 = vld [vmem:[%s1] sm:$0xff]
    %v140 = vld [vmem:[%s1 + $0x8] sm:$0xff]
    %141 = vset.pattern.permute.xlu0 0
    %142 = vperm.xlu0 %141, %v139
    %v143 = vpop.permute.xlu0 %142
    %144 = vset.pattern.permute.xlu0 0
    %145 = vperm.xlu0 %144, %v140
    %v146 = vpop.permute.xlu0 %145
    %vm147 = vcmp.eq.s32.totalorder %v124, %v143
    %vm148 = vcmp.eq.s32.totalorder %v124, %v146
    %v149 = vsel %vm147, 1, 0
    %v150 = vsel %vm148, 1, 0
    %v151 = vcvt.s32.f32 %v149
    %v152 = vcvt.s32.f32 %v150
    %153 = vmatprep.subr.mxu0 0.0
    %154 = vmatpush1.msra.mxu0 %v107
    %155 = vmatprep.subr.mxu0 0.0
    %156 = vmatpush1.msra.mxu0 %v108
    %157 = vmatprep.subr.mxu0 0.0
    %158 = vmatpush1.msra.mxu0 %v109
    %159 = vmatprep.subr.mxu0 0.0
    %160 = vmatpush1.msra.mxu0 %v110
    %161 = vmatprep.subr.mxu0 0.0
    %162 = vmatpush1.msra.mxu0 %v111
    %163 = vmatprep.subr.mxu0 0.0
    %164 = vmatpush1.msra.mxu0 %v112
    %165 = vmatprep.subr.mxu0 0.0
    %166 = vmatpush1.msra.mxu0 %v113
    %167 = vmatprep.subr.mxu0 0.0
    %168 = vmatpush1.msra.mxu0 %v114
    %169 = vmatprep.subr.mxu0 0.0
    %170 = vmatpush1.msra.mxu0 %v115
    %171 = vmatprep.subr.mxu0 0.0
    %172 = vmatpush1.msra.mxu0 %v116
    %173 = vmatprep.subr.mxu0 0.0
    %174 = vmatpush1.msra.mxu0 %v117
    %175 = vmatprep.subr.mxu0 0.0
    %176 = vmatpush1.msra.mxu0 %v118
    %177 = vmatprep.subr.mxu0 0.0
    %178 = vmatpush1.msra.mxu0 %v119
    %179 = vmatprep.subr.mxu0 0.0
    %180 = vmatpush1.msra.mxu0 %v120
    %181 = vmatprep.subr.mxu0 0.0
    %182 = vmatpush1.msra.mxu0 %v121
    %183 = vmatprep.subr.mxu0 0.0
    %184 = vmatpush1.msra.mxu0 %v122
    %185 = vmatprep.subr.mxu0 0.0
    %186 = vmatpush1.msra.mxu0 0.0
    %187 = vmatprep.subr.mxu0 0.0
    %188 = vmatpush1.msra.mxu0 0.0
    %189 = vmatprep.subr.mxu0 0.0
    %190 = vmatpush1.msra.mxu0 0.0
    %191 = vmatprep.subr.mxu0 0.0
    %192 = vmatpush1.msra.mxu0 0.0
    %193 = vmatprep.subr.mxu0 0.0
    %194 = vmatpush1.msra.mxu0 0.0
    %195 = vmatprep.subr.mxu0 0.0
    %196 = vmatpush1.msra.mxu0 0.0
    %197 = vmatprep.subr.mxu0 0.0
    %198 = vmatpush1.msra.mxu0 0.0
    %199 = vmatprep.subr.mxu0 0.0
    %200 = vmatpush1.msra.mxu0 0.0
    %201 = vmatprep.subr.mxu0 0.0
    %202 = vmatpush1.msra.mxu0 0.0
    %203 = vmatprep.subr.mxu0 0.0
    %204 = vmatpush1.msra.mxu0 0.0
    %205 = vmatprep.subr.mxu0 0.0
    %206 = vmatpush1.msra.mxu0 0.0
    %207 = vmatprep.subr.mxu0 0.0
    %208 = vmatpush1.msra.mxu0 0.0
    %209 = vmatprep.subr.mxu0 0.0
    %210 = vmatpush1.msra.mxu0 0.0
    %211 = vmatprep.subr.mxu0 0.0
    %212 = vmatpush1.msra.mxu0 0.0
    %213 = vmatprep.subr.mxu0 0.0
    %214 = vmatpush1.msra.mxu0 0.0
    %215 = vmatprep.subr.mxu0 0.0
    %216 = vmatpush1.msra.mxu0 0.0
    %217 = vmatprep.mubr.f32.mxu0 0.0
    %218 = vmatmul.mubr.f32.gmra.mrb[0].mxu0 %v137
    %v219 = vpop.f32.mrb[0].mxu0
    %v220 = vadd.f32 0.0, %v219
    %v221 = vpop.f32.mrb[0].mxu0
    %222 = vmatprep.mubr.f32.mxu0 0.0
    %223 = vmatmul.mubr.f32.gmra.mrb[0].mxu0 %v138
    %v224 = vpop.f32.mrb[0].mxu0
    %v225 = vadd.f32 0.0, %v224
    %v226 = vpop.f32.mrb[0].mxu0
    %227 = vdwg.mxu0
    %228 = vmatprep.subr.mxu0 0.0
    %229 = vmatpush1.msra.mxu0 %v107
    %230 = vmatprep.subr.mxu0 0.0
    %231 = vmatpush1.msra.mxu0 %v108
    %232 = vmatprep.subr.mxu0 0.0
    %233 = vmatpush1.msra.mxu0 %v109
    %234 = vmatprep.subr.mxu0 0.0
    %235 = vmatpush1.msra.mxu0 %v110
    %236 = vmatprep.subr.mxu0 0.0
    %237 = vmatpush1.msra.mxu0 %v111
    %238 = vmatprep.subr.mxu0 0.0
    %239 = vmatpush1.msra.mxu0 %v112
    %240 = vmatprep.subr.mxu0 0.0
    %241 = vmatpush1.msra.mxu0 %v113
    %242 = vmatprep.subr.mxu0 0.0
    %243 = vmatpush1.msra.mxu0 %v114
    %244 = vmatprep.subr.mxu0 0.0
    %245 = vmatpush1.msra.mxu0 %v115
    %246 = vmatprep.subr.mxu0 0.0
    %247 = vmatpush1.msra.mxu0 %v116
    %248 = vmatprep.subr.mxu0 0.0
    %249 = vmatpush1.msra.mxu0 %v117
    %250 = vmatprep.subr.mxu0 0.0
    %251 = vmatpush1.msra.mxu0 %v118
    %252 = vmatprep.subr.mxu0 0.0
    %253 = vmatpush1.msra.mxu0 %v119
    %254 = vmatprep.subr.mxu0 0.0
    %255 = vmatpush1.msra.mxu0 %v120
    %256 = vmatprep.subr.mxu0 0.0
    %257 = vmatpush1.msra.mxu0 %v121
    %258 = vmatprep.subr.mxu0 0.0
    %259 = vmatpush1.msra.mxu0 %v122
    %260 = vmatprep.subr.mxu0 0.0
    %261 = vmatpush1.msra.mxu0 0.0
    %262 = vmatprep.subr.mxu0 0.0
    %263 = vmatpush1.msra.mxu0 0.0
    %264 = vmatprep.subr.mxu0 0.0
    %265 = vmatpush1.msra.mxu0 0.0
    %266 = vmatprep.subr.mxu0 0.0
    %267 = vmatpush1.msra.mxu0 0.0
    %268 = vmatprep.subr.mxu0 0.0
    %269 = vmatpush1.msra.mxu0 0.0
    %270 = vmatprep.subr.mxu0 0.0
    %271 = vmatpush1.msra.mxu0 0.0
    %272 = vmatprep.subr.mxu0 0.0
    %273 = vmatpush1.msra.mxu0 0.0
    %274 = vmatprep.subr.mxu0 0.0
    %275 = vmatpush1.msra.mxu0 0.0
    %276 = vmatprep.subr.mxu0 0.0
    %277 = vmatpush1.msra.mxu0 0.0
    %278 = vmatprep.subr.mxu0 0.0
    %279 = vmatpush1.msra.mxu0 0.0
    %280 = vmatprep.subr.mxu0 0.0
    %281 = vmatpush1.msra.mxu0 0.0
    %282 = vmatprep.subr.mxu0 0.0
    %283 = vmatpush1.msra.mxu0 0.0
    %284 = vmatprep.subr.mxu0 0.0
    %285 = vmatpush1.msra.mxu0 0.0
    %286 = vmatprep.subr.mxu0 0.0
    %287 = vmatpush1.msra.mxu0 0.0
    %288 = vmatprep.subr.mxu0 0.0
    %289 = vmatpush1.msra.mxu0 0.0
    %290 = vmatprep.subr.mxu0 0.0
    %291 = vmatpush1.msra.mxu0 0.0
    %292 = vmatprep.mubr.f32.mxu0 0.0
    %293 = vmatmul.mubr.f32.gmra.mrb[0].mxu0 %v151
    %v294 = vpop.f32.mrb[0].mxu0
    %v295 = vadd.f32 0.0, %v294
    %v296 = vpop.f32.mrb[0].mxu0
    %297 = vmatprep.mubr.f32.mxu0 0.0
    %298 = vmatmul.mubr.f32.gmra.mrb[0].mxu0 %v152
    %v299 = vpop.f32.mrb[0].mxu0
    %v300 = vadd.f32 0.0, %v299
    %v301 = vpop.f32.mrb[0].mxu0
    %302 = vdwg.mxu0
    %v303 = vld [vmem:[#allocation5] sm:$0xff]
    %v304 = vld [vmem:[#allocation5 + $0x8] sm:$0xff]
    %v305 = vld [vmem:[#allocation5 + $0x10] sm:$0xff]
    %v306 = vld [vmem:[#allocation5 + $0x18] sm:$0xff]
    %v307 = vld [vmem:[#allocation5 + $0x20] sm:$0xff]
    %v308 = vld [vmem:[#allocation5 + $0x28] sm:$0xff]
    %v309 = vld [vmem:[#allocation5 + $0x30] sm:$0xff]
    %v310 = vld [vmem:[#allocation5 + $0x38] sm:$0xff]
    %v311 = vld [vmem:[#allocation5 + $0x40] sm:$0xff]
    %v312 = vld [vmem:[#allocation5 + $0x48] sm:$0xff]
    %v313 = vld [vmem:[#allocation5 + $0x50] sm:$0xff]
    %v314 = vld [vmem:[#allocation5 + $0x58] sm:$0xff]
    %v315 = vld [vmem:[#allocation5 + $0x60] sm:$0xff]
    %v316 = vld [vmem:[#allocation5 + $0x68] sm:$0xff]
    %v317 = vld [vmem:[#allocation5 + $0x70] sm:$0xff]
    %v318 = vld [vmem:[#allocation5 + $0x78] sm:$0xff]
    %v319 = vld [vmem:[#allocation7] sm:$0xff]
    %v320 = vld [vmem:[#allocation7 + $0x8] sm:$0xff]
    %v321 = vld [vmem:[#allocation7 + $0x10] sm:$0xff]
    %v322 = vld [vmem:[#allocation7 + $0x18] sm:$0xff]
    %v323 = vld [vmem:[#allocation7 + $0x20] sm:$0xff]
    %v324 = vld [vmem:[#allocation7 + $0x28] sm:$0xff]
    %v325 = vld [vmem:[#allocation7 + $0x30] sm:$0xff]
    %v326 = vld [vmem:[#allocation7 + $0x38] sm:$0xff]
    %v327 = vld [vmem:[#allocation7 + $0x40] sm:$0xff]
    %v328 = vld [vmem:[#allocation7 + $0x48] sm:$0xff]
    %v329 = vld [vmem:[#allocation7 + $0x50] sm:$0xff]
    %v330 = vld [vmem:[#allocation7 + $0x58] sm:$0xff]
    %v331 = vld [vmem:[#allocation7 + $0x60] sm:$0xff]
    %v332 = vld [vmem:[#allocation7 + $0x68] sm:$0xff]
    %v333 = vld [vmem:[#allocation7 + $0x70] sm:$0xff]
    %v334 = vld [vmem:[#allocation7 + $0x78] sm:$0xff]
    %335 = vmatprep.subr.mxu0 0.0
    %336 = vmatpush1.msra.mxu0 %v319
    %337 = vmatprep.subr.mxu0 0.0
    %338 = vmatpush1.msra.mxu0 %v320
    %339 = vmatprep.subr.mxu0 0.0
    %340 = vmatpush1.msra.mxu0 %v321
    %341 = vmatprep.subr.mxu0 0.0
    %342 = vmatpush1.msra.mxu0 %v322
    %343 = vmatprep.subr.mxu0 0.0
    %344 = vmatpush1.msra.mxu0 %v323
    %345 = vmatprep.subr.mxu0 0.0
    %346 = vmatpush1.msra.mxu0 %v324
    %347 = vmatprep.subr.mxu0 0.0
    %348 = vmatpush1.msra.mxu0 %v325
    %349 = vmatprep.subr.mxu0 0.0
    %350 = vmatpush1.msra.mxu0 %v326
    %351 = vmatprep.subr.mxu0 0.0
    %352 = vmatpush1.msra.mxu0 %v327
    %353 = vmatprep.subr.mxu0 0.0
    %354 = vmatpush1.msra.mxu0 %v328
    %355 = vmatprep.subr.mxu0 0.0
    %356 = vmatpush1.msra.mxu0 %v329
    %357 = vmatprep.subr.mxu0 0.0
    %358 = vmatpush1.msra.mxu0 %v330
    %359 = vmatprep.subr.mxu0 0.0
    %360 = vmatpush1.msra.mxu0 %v331
    %361 = vmatprep.subr.mxu0 0.0
    %362 = vmatpush1.msra.mxu0 %v332
    %363 = vmatprep.subr.mxu0 0.0
    %364 = vmatpush1.msra.mxu0 %v333
    %365 = vmatprep.subr.mxu0 0.0
    %366 = vmatpush1.msra.mxu0 %v334
    %367 = vmatprep.subr.mxu0 0.0
    %368 = vmatpush1.msra.mxu0 0.0
    %369 = vmatprep.subr.mxu0 0.0
    %370 = vmatpush1.msra.mxu0 0.0
    %371 = vmatprep.subr.mxu0 0.0
    %372 = vmatpush1.msra.mxu0 0.0
    %373 = vmatprep.subr.mxu0 0.0
    %374 = vmatpush1.msra.mxu0 0.0
    %375 = vmatprep.subr.mxu0 0.0
    %376 = vmatpush1.msra.mxu0 0.0
    %377 = vmatprep.subr.mxu0 0.0
    %378 = vmatpush1.msra.mxu0 0.0
    %379 = vmatprep.subr.mxu0 0.0
    %380 = vmatpush1.msra.mxu0 0.0
    %381 = vmatprep.subr.mxu0 0.0
    %382 = vmatpush1.msra.mxu0 0.0
    %383 = vmatprep.subr.mxu0 0.0
    %384 = vmatpush1.msra.mxu0 0.0
    %385 = vmatprep.subr.mxu0 0.0
    %386 = vmatpush1.msra.mxu0 0.0
    %387 = vmatprep.subr.mxu0 0.0
    %388 = vmatpush1.msra.mxu0 0.0
    %389 = vmatprep.subr.mxu0 0.0
    %390 = vmatpush1.msra.mxu0 0.0
    %391 = vmatprep.subr.mxu0 0.0
    %392 = vmatpush1.msra.mxu0 0.0
    %393 = vmatprep.subr.mxu0 0.0
    %394 = vmatpush1.msra.mxu0 0.0
    %395 = vmatprep.subr.mxu0 0.0
    %396 = vmatpush1.msra.mxu0 0.0
    %397 = vmatprep.subr.mxu0 0.0
    %398 = vmatpush1.msra.mxu0 0.0
    %399 = vmatprep.mubr.f32.mxu0 0.0
    %400 = vmatmul.mubr.f32.gmra.mrb[0].mxu0 %v295
    %v401 = vpop.f32.mrb[0].mxu0
    %v402 = vadd.f32 0.0, %v401
    %v403 = vpop.f32.mrb[0].mxu0
    %404 = vmatprep.mubr.f32.mxu0 0.0
    %405 = vmatmul.mubr.f32.gmra.mrb[0].mxu0 %v300
    %v406 = vpop.f32.mrb[0].mxu0
    %v407 = vadd.f32 0.0, %v406
    %v408 = vpop.f32.mrb[0].mxu0
    %409 = vdwg.mxu0
    %410 = vmatprep.subr.mxu0 0.0
    %411 = vmatpush1.msra.mxu0 %v303
    %412 = vmatprep.subr.mxu0 0.0
    %413 = vmatpush1.msra.mxu0 %v304
    %414 = vmatprep.subr.mxu0 0.0
    %415 = vmatpush1.msra.mxu0 %v305
    %416 = vmatprep.subr.mxu0 0.0
    %417 = vmatpush1.msra.mxu0 %v306
    %418 = vmatprep.subr.mxu0 0.0
    %419 = vmatpush1.msra.mxu0 %v307
    %420 = vmatprep.subr.mxu0 0.0
    %421 = vmatpush1.msra.mxu0 %v308
    %422 = vmatprep.subr.mxu0 0.0
    %423 = vmatpush1.msra.mxu0 %v309
    %424 = vmatprep.subr.mxu0 0.0
    %425 = vmatpush1.msra.mxu0 %v310
    %426 = vmatprep.subr.mxu0 0.0
    %427 = vmatpush1.msra.mxu0 %v311
    %428 = vmatprep.subr.mxu0 0.0
    %429 = vmatpush1.msra.mxu0 %v312
    %430 = vmatprep.subr.mxu0 0.0
    %431 = vmatpush1.msra.mxu0 %v313
    %432 = vmatprep.subr.mxu0 0.0
    %433 = vmatpush1.msra.mxu0 %v314
    %434 = vmatprep.subr.mxu0 0.0
    %435 = vmatpush1.msra.mxu0 %v315
    %436 = vmatprep.subr.mxu0 0.0
    %437 = vmatpush1.msra.mxu0 %v316
    %438 = vmatprep.subr.mxu0 0.0
    %439 = vmatpush1.msra.mxu0 %v317
    %440 = vmatprep.subr.mxu0 0.0
    %441 = vmatpush1.msra.mxu0 %v318
    %442 = vmatprep.subr.mxu0 0.0
    %443 = vmatpush1.msra.mxu0 0.0
    %444 = vmatprep.subr.mxu0 0.0
    %445 = vmatpush1.msra.mxu0 0.0
    %446 = vmatprep.subr.mxu0 0.0
    %447 = vmatpush1.msra.mxu0 0.0
    %448 = vmatprep.subr.mxu0 0.0
    %449 = vmatpush1.msra.mxu0 0.0
    %450 = vmatprep.subr.mxu0 0.0
    %451 = vmatpush1.msra.mxu0 0.0
    %452 = vmatprep.subr.mxu0 0.0
    %453 = vmatpush1.msra.mxu0 0.0
    %454 = vmatprep.subr.mxu0 0.0
    %455 = vmatpush1.msra.mxu0 0.0
    %456 = vmatprep.subr.mxu0 0.0
    %457 = vmatpush1.msra.mxu0 0.0
    %458 = vmatprep.subr.mxu0 0.0
    %459 = vmatpush1.msra.mxu0 0.0
    %460 = vmatprep.subr.mxu0 0.0
    %461 = vmatpush1.msra.mxu0 0.0
    %462 = vmatprep.subr.mxu0 0.0
    %463 = vmatpush1.msra.mxu0 0.0
    %464 = vmatprep.subr.mxu0 0.0
    %465 = vmatpush1.msra.mxu0 0.0
    %466 = vmatprep.subr.mxu0 0.0
    %467 = vmatpush1.msra.mxu0 0.0
    %468 = vmatprep.subr.mxu0 0.0
    %469 = vmatpush1.msra.mxu0 0.0
    %470 = vmatprep.subr.mxu0 0.0
    %471 = vmatpush1.msra.mxu0 0.0
    %472 = vmatprep.subr.mxu0 0.0
    %473 = vmatpush1.msra.mxu0 0.0
    %474 = vmatprep.mubr.f32.mxu0 0.0
    %475 = vmatmul.mubr.f32.gmra.mrb[0].mxu0 %v220
    %v476 = vpop.f32.mrb[0].mxu0
    %v477 = vadd.f32 %v402, %v476
    %v478 = vpop.f32.mrb[0].mxu0
    %479 = vmatprep.mubr.f32.mxu0 0.0
    %480 = vmatmul.mubr.f32.gmra.mrb[0].mxu0 %v225
    %v481 = vpop.f32.mrb[0].mxu0
    %v482 = vadd.f32 %v407, %v481
    %v483 = vpop.f32.mrb[0].mxu0
    %484 = vdwg.mxu0
    %v485 = vld [vmem:[%s5] sm:$0x1]
    %v487 = vlaneseq
    %v488 = vshrl.u32 %v487, 7
    %v489 = vsub.s32 0, %v488
    %v490 = vrot.slane %v485, %v489
    %v492 = vadd.f32 %v477, %v490
    %v493 = vadd.f32 %v482, %v490
    %v494 = vmax.f32 %v492, 0.0
    %v495 = vmax.f32 %v493, 0.0
    %v496 = vld [vmem:[#allocation8] sm:$0xff]
    %v497 = vld [vmem:[#allocation8 + $0x8] sm:$0xff]
    %v498 = vld [vmem:[#allocation8 + $0x10] sm:$0xff]
    %v499 = vld [vmem:[#allocation8 + $0x18] sm:$0xff]
    %v500 = vld [vmem:[#allocation8 + $0x20] sm:$0xff]
    %v501 = vld [vmem:[#allocation8 + $0x28] sm:$0xff]
    %v502 = vld [vmem:[#allocation8 + $0x30] sm:$0xff]
    %v503 = vld [vmem:[#allocation8 + $0x38] sm:$0xff]
    %v504 = vld [vmem:[#allocation8 + $0x40] sm:$0xff]
    %v505 = vld [vmem:[#allocation8 + $0x48] sm:$0xff]
    %v506 = vld [vmem:[#allocation8 + $0x50] sm:$0xff]
    %v507 = vld [vmem:[#allocation8 + $0x58] sm:$0xff]
    %v508 = vld [vmem:[#allocation8 + $0x60] sm:$0xff]
    %v509 = vld [vmem:[#allocation8 + $0x68] sm:$0xff]
    %v510 = vld [vmem:[#allocation8 + $0x70] sm:$0xff]
    %v511 = vld [vmem:[#allocation8 + $0x78] sm:$0xff]
    %v512 = vld [vmem:[%s7] sm:$0x1]
    %v514 = vlaneseq
    %v515 = vshrl.u32 %v514, 7
    %v516 = vsub.s32 0, %v515
    %v517 = vrot.slane %v512, %v516
    %519 = vmatprep.subr.mxu0 0.0
    %520 = vmatpush1.msra.mxu0 %v496
    %521 = vmatprep.subr.mxu0 0.0
    %522 = vmatpush1.msra.mxu0 %v497
    %523 = vmatprep.subr.mxu0 0.0
    %524 = vmatpush1.msra.mxu0 %v498
    %525 = vmatprep.subr.mxu0 0.0
    %526 = vmatpush1.msra.mxu0 %v499
    %527 = vmatprep.subr.mxu0 0.0
    %528 = vmatpush1.msra.mxu0 %v500
    %529 = vmatprep.subr.mxu0 0.0
    %530 = vmatpush1.msra.mxu0 %v501
    %531 = vmatprep.subr.mxu0 0.0
    %532 = vmatpush1.msra.mxu0 %v502
    %533 = vmatprep.subr.mxu0 0.0
    %534 = vmatpush1.msra.mxu0 %v503
    %535 = vmatprep.subr.mxu0 0.0
    %536 = vmatpush1.msra.mxu0 %v504
    %537 = vmatprep.subr.mxu0 0.0
    %538 = vmatpush1.msra.mxu0 %v505
    %539 = vmatprep.subr.mxu0 0.0
    %540 = vmatpush1.msra.mxu0 %v506
    %541 = vmatprep.subr.mxu0 0.0
    %542 = vmatpush1.msra.mxu0 %v507
    %543 = vmatprep.subr.mxu0 0.0
    %544 = vmatpush1.msra.mxu0 %v508
    %545 = vmatprep.subr.mxu0 0.0
    %546 = vmatpush1.msra.mxu0 %v509
    %547 = vmatprep.subr.mxu0 0.0
    %548 = vmatpush1.msra.mxu0 %v510
    %549 = vmatprep.subr.mxu0 0.0
    %550 = vmatpush1.msra.mxu0 %v511
    %551 = vmatprep.subr.mxu0 0.0
    %552 = vmatpush1.msra.mxu0 0.0
    %553 = vmatprep.subr.mxu0 0.0
    %554 = vmatpush1.msra.mxu0 0.0
    %555 = vmatprep.subr.mxu0 0.0
    %556 = vmatpush1.msra.mxu0 0.0
    %557 = vmatprep.subr.mxu0 0.0
    %558 = vmatpush1.msra.mxu0 0.0
    %559 = vmatprep.subr.mxu0 0.0
    %560 = vmatpush1.msra.mxu0 0.0
    %561 = vmatprep.subr.mxu0 0.0
    %562 = vmatpush1.msra.mxu0 0.0
    %563 = vmatprep.subr.mxu0 0.0
    %564 = vmatpush1.msra.mxu0 0.0
    %565 = vmatprep.subr.mxu0 0.0
    %566 = vmatpush1.msra.mxu0 0.0
    %567 = vmatprep.subr.mxu0 0.0
    %568 = vmatpush1.msra.mxu0 0.0
    %569 = vmatprep.subr.mxu0 0.0
    %570 = vmatpush1.msra.mxu0 0.0
    %571 = vmatprep.subr.mxu0 0.0
    %572 = vmatpush1.msra.mxu0 0.0
    %573 = vmatprep.subr.mxu0 0.0
    %574 = vmatpush1.msra.mxu0 0.0
    %575 = vmatprep.subr.mxu0 0.0
    %576 = vmatpush1.msra.mxu0 0.0
    %577 = vmatprep.subr.mxu0 0.0
    %578 = vmatpush1.msra.mxu0 0.0
    %579 = vmatprep.subr.mxu0 0.0
    %580 = vmatpush1.msra.mxu0 0.0
    %581 = vmatprep.subr.mxu0 0.0
    %582 = vmatpush1.msra.mxu0 0.0
    %583 = vmatprep.mubr.f32.mxu0 0.0
    %584 = vmatmul.mubr.f32.gmra.mrb[0].mxu0 %v494
    %v585 = vpop.f32.mrb[0].mxu0
    %v586 = vadd.f32 %v517, %v585
    %v587 = vpop.f32.mrb[0].mxu0
    %588 = vmatprep.mubr.f32.mxu0 0.0
    %589 = vmatmul.mubr.f32.gmra.mrb[0].mxu0 %v495
    %v590 = vpop.f32.mrb[0].mxu0
    %v591 = vadd.f32 %v517, %v590
    %v592 = vpop.f32.mrb[0].mxu0
    %593 = vdwg.mxu0
    %v594 = vmax.f32 %v586, 0.0
    %v595 = vmax.f32 %v591, 0.0
    %s596 = scalar_lea.vmem [#allocation8], 128
    %v597 = vld [vmem:[%s596] sm:$0xff]
    %v598 = vld [vmem:[%s596 + $0x8] sm:$0xff]
    %v599 = vld [vmem:[%s596 + $0x10] sm:$0xff]
    %v600 = vld [vmem:[%s596 + $0x18] sm:$0xff]
    %v601 = vld [vmem:[%s596 + $0x20] sm:$0xff]
    %v602 = vld [vmem:[%s596 + $0x28] sm:$0xff]
    %v603 = vld [vmem:[%s596 + $0x30] sm:$0xff]
    %v604 = vld [vmem:[%s596 + $0x38] sm:$0xff]
    %v605 = vld [vmem:[%s596 + $0x40] sm:$0xff]
    %v606 = vld [vmem:[%s596 + $0x48] sm:$0xff]
    %v607 = vld [vmem:[%s596 + $0x50] sm:$0xff]
    %v608 = vld [vmem:[%s596 + $0x58] sm:$0xff]
    %v609 = vld [vmem:[%s596 + $0x60] sm:$0xff]
    %v610 = vld [vmem:[%s596 + $0x68] sm:$0xff]
    %v611 = vld [vmem:[%s596 + $0x70] sm:$0xff]
    %v612 = vld [vmem:[%s596 + $0x78] sm:$0xff]
    %s613 = scalar_lea.vmem %s7, 1
    %v614 = vld [vmem:[%s613] sm:$0x1]
    %v616 = vlaneseq
    %v617 = vshrl.u32 %v616, 7
    %v618 = vsub.s32 0, %v617
    %v619 = vrot.slane %v614, %v618
    %621 = vmatprep.subr.mxu0 0.0
    %622 = vmatpush1.msra.mxu0 %v597
    %623 = vmatprep.subr.mxu0 0.0
    %624 = vmatpush1.msra.mxu0 %v598
    %625 = vmatprep.subr.mxu0 0.0
    %626 = vmatpush1.msra.mxu0 %v599
    %627 = vmatprep.subr.mxu0 0.0
    %628 = vmatpush1.msra.mxu0 %v600
    %629 = vmatprep.subr.mxu0 0.0
    %630 = vmatpush1.msra.mxu0 %v601
    %631 = vmatprep.subr.mxu0 0.0
    %632 = vmatpush1.msra.mxu0 %v602
    %633 = vmatprep.subr.mxu0 0.0
    %634 = vmatpush1.msra.mxu0 %v603
    %635 = vmatprep.subr.mxu0 0.0
    %636 = vmatpush1.msra.mxu0 %v604
    %637 = vmatprep.subr.mxu0 0.0
    %638 = vmatpush1.msra.mxu0 %v605
    %639 = vmatprep.subr.mxu0 0.0
    %640 = vmatpush1.msra.mxu0 %v606
    %641 = vmatprep.subr.mxu0 0.0
    %642 = vmatpush1.msra.mxu0 %v607
    %643 = vmatprep.subr.mxu0 0.0
    %644 = vmatpush1.msra.mxu0 %v608
    %645 = vmatprep.subr.mxu0 0.0
    %646 = vmatpush1.msra.mxu0 %v609
    %647 = vmatprep.subr.mxu0 0.0
    %648 = vmatpush1.msra.mxu0 %v610
    %649 = vmatprep.subr.mxu0 0.0
    %650 = vmatpush1.msra.mxu0 %v611
    %651 = vmatprep.subr.mxu0 0.0
    %652 = vmatpush1.msra.mxu0 %v612
    %653 = vmatprep.subr.mxu0 0.0
    %654 = vmatpush1.msra.mxu0 0.0
    %655 = vmatprep.subr.mxu0 0.0
    %656 = vmatpush1.msra.mxu0 0.0
    %657 = vmatprep.subr.mxu0 0.0
    %658 = vmatpush1.msra.mxu0 0.0
    %659 = vmatprep.subr.mxu0 0.0
    %660 = vmatpush1.msra.mxu0 0.0
    %661 = vmatprep.subr.mxu0 0.0
    %662 = vmatpush1.msra.mxu0 0.0
    %663 = vmatprep.subr.mxu0 0.0
    %664 = vmatpush1.msra.mxu0 0.0
    %665 = vmatprep.subr.mxu0 0.0
    %666 = vmatpush1.msra.mxu0 0.0
    %667 = vmatprep.subr.mxu0 0.0
    %668 = vmatpush1.msra.mxu0 0.0
    %669 = vmatprep.subr.mxu0 0.0
    %670 = vmatpush1.msra.mxu0 0.0
    %671 = vmatprep.subr.mxu0 0.0
    %672 = vmatpush1.msra.mxu0 0.0
    %673 = vmatprep.subr.mxu0 0.0
    %674 = vmatpush1.msra.mxu0 0.0
    %675 = vmatprep.subr.mxu0 0.0
    %676 = vmatpush1.msra.mxu0 0.0
    %677 = vmatprep.subr.mxu0 0.0
    %678 = vmatpush1.msra.mxu0 0.0
    %679 = vmatprep.subr.mxu0 0.0
    %680 = vmatpush1.msra.mxu0 0.0
    %681 = vmatprep.subr.mxu0 0.0
    %682 = vmatpush1.msra.mxu0 0.0
    %683 = vmatprep.subr.mxu0 0.0
    %684 = vmatpush1.msra.mxu0 0.0
    %685 = vmatprep.mubr.f32.mxu0 0.0
    %686 = vmatmul.mubr.f32.gmra.mrb[0].mxu0 %v594
    %v687 = vpop.f32.mrb[0].mxu0
    %v688 = vadd.f32 %v619, %v687
    %v689 = vpop.f32.mrb[0].mxu0
    %690 = vmatprep.mubr.f32.mxu0 0.0
    %691 = vmatmul.mubr.f32.gmra.mrb[0].mxu0 %v595
    %v692 = vpop.f32.mrb[0].mxu0
    %v693 = vadd.f32 %v619, %v692
    %v694 = vpop.f32.mrb[0].mxu0
    %695 = vdwg.mxu0
    %v696 = vmax.f32 %v688, 0.0
    %v697 = vmax.f32 %v693, 0.0
    %698 = vst [vmem:[#allocation12] sm:$0xff] %v696
    %699 = vst [vmem:[#allocation12 + $0x8] sm:$0xff] %v697
    %v700 = vld [vmem:[#allocation10] sm:$0xff]
    %v701 = vld [vmem:[#allocation10 + $0x8] sm:$0xff]
    %v702 = vld [vmem:[#allocation10 + $0x10] sm:$0xff]
    %v703 = vld [vmem:[#allocation10 + $0x18] sm:$0xff]
    %v704 = vld [vmem:[#allocation10 + $0x20] sm:$0xff]
    %v705 = vld [vmem:[#allocation10 + $0x28] sm:$0xff]
    %v706 = vld [vmem:[#allocation10 + $0x30] sm:$0xff]
    %v707 = vld [vmem:[#allocation10 + $0x38] sm:$0xff]
    %v708 = vld [vmem:[#allocation10 + $0x40] sm:$0xff]
    %v709 = vld [vmem:[#allocation10 + $0x48] sm:$0xff]
    %v710 = vld [vmem:[#allocation10 + $0x50] sm:$0xff]
    %v711 = vld [vmem:[#allocation10 + $0x58] sm:$0xff]
    %v712 = vld [vmem:[#allocation10 + $0x60] sm:$0xff]
    %v713 = vld [vmem:[#allocation10 + $0x68] sm:$0xff]
    %v714 = vld [vmem:[#allocation10 + $0x70] sm:$0xff]
    %v715 = vld [vmem:[#allocation10 + $0x78] sm:$0xff]
    %v716 = vld [vmem:[%s9] sm:$0x1]
    %v718 = vlaneseq
    %v719 = vshrl.u32 %v718, 7
    %v720 = vsub.s32 0, %v719
    %v721 = vrot.slane %v716, %v720
    %723 = vmatprep.subr.mxu0 0.0
    %724 = vmatpush1.msra.mxu0 %v700
    %725 = vmatprep.subr.mxu0 0.0
    %726 = vmatpush1.msra.mxu0 %v701
    %727 = vmatprep.subr.mxu0 0.0
    %728 = vmatpush1.msra.mxu0 %v702
    %729 = vmatprep.subr.mxu0 0.0
    %730 = vmatpush1.msra.mxu0 %v703
    %731 = vmatprep.subr.mxu0 0.0
    %732 = vmatpush1.msra.mxu0 %v704
    %733 = vmatprep.subr.mxu0 0.0
    %734 = vmatpush1.msra.mxu0 %v705
    %735 = vmatprep.subr.mxu0 0.0
    %736 = vmatpush1.msra.mxu0 %v706
    %737 = vmatprep.subr.mxu0 0.0
    %738 = vmatpush1.msra.mxu0 %v707
    %739 = vmatprep.subr.mxu0 0.0
    %740 = vmatpush1.msra.mxu0 %v708
    %741 = vmatprep.subr.mxu0 0.0
    %742 = vmatpush1.msra.mxu0 %v709
    %743 = vmatprep.subr.mxu0 0.0
    %744 = vmatpush1.msra.mxu0 %v710
    %745 = vmatprep.subr.mxu0 0.0
    %746 = vmatpush1.msra.mxu0 %v711
    %747 = vmatprep.subr.mxu0 0.0
    %748 = vmatpush1.msra.mxu0 %v712
    %749 = vmatprep.subr.mxu0 0.0
    %750 = vmatpush1.msra.mxu0 %v713
    %751 = vmatprep.subr.mxu0 0.0
    %752 = vmatpush1.msra.mxu0 %v714
    %753 = vmatprep.subr.mxu0 0.0
    %754 = vmatpush1.msra.mxu0 %v715
    %755 = vmatprep.subr.mxu0 0.0
    %756 = vmatpush1.msra.mxu0 0.0
    %757 = vmatprep.subr.mxu0 0.0
    %758 = vmatpush1.msra.mxu0 0.0
    %759 = vmatprep.subr.mxu0 0.0
    %760 = vmatpush1.msra.mxu0 0.0
    %761 = vmatprep.subr.mxu0 0.0
    %762 = vmatpush1.msra.mxu0 0.0
    %763 = vmatprep.subr.mxu0 0.0
    %764 = vmatpush1.msra.mxu0 0.0
    %765 = vmatprep.subr.mxu0 0.0
    %766 = vmatpush1.msra.mxu0 0.0
    %767 = vmatprep.subr.mxu0 0.0
    %768 = vmatpush1.msra.mxu0 0.0
    %769 = vmatprep.subr.mxu0 0.0
    %770 = vmatpush1.msra.mxu0 0.0
    %771 = vmatprep.subr.mxu0 0.0
    %772 = vmatpush1.msra.mxu0 0.0
    %773 = vmatprep.subr.mxu0 0.0
    %774 = vmatpush1.msra.mxu0 0.0
    %775 = vmatprep.subr.mxu0 0.0
    %776 = vmatpush1.msra.mxu0 0.0
    %777 = vmatprep.subr.mxu0 0.0
    %778 = vmatpush1.msra.mxu0 0.0
    %779 = vmatprep.subr.mxu0 0.0
    %780 = vmatpush1.msra.mxu0 0.0
    %781 = vmatprep.subr.mxu0 0.0
    %782 = vmatpush1.msra.mxu0 0.0
    %783 = vmatprep.subr.mxu0 0.0
    %784 = vmatpush1.msra.mxu0 0.0
    %785 = vmatprep.subr.mxu0 0.0
    %786 = vmatpush1.msra.mxu0 0.0
    %787 = vmatprep.mubr.f32.mxu0 0.0
    %788 = vmatmul.mubr.f32.gmra.mrb[0].mxu0 %v696
    %v789 = vpop.f32.mrb[0].mxu0
    %v790 = vadd.f32 %v721, %v789
    %v791 = vpop.f32.mrb[0].mxu0
    %792 = vmatprep.mubr.f32.mxu0 0.0
    %793 = vmatmul.mubr.f32.gmra.mrb[0].mxu0 %v697
    %v794 = vpop.f32.mrb[0].mxu0
    %v795 = vadd.f32 %v721, %v794
    %v796 = vpop.f32.mrb[0].mxu0
    %797 = vdwg.mxu0
    %798 = vst [vmem:[#allocation11] sm:$0xff] %v790
    %799 = vst [vmem:[#allocation11 + $0x8] sm:$0xff] %v795
    // Predicated region
    $region62: #{tpu_custom_call.1} parent=1 // pred_check
      _
    $region63: #{tpu_custom_call.1} parent=1 // pred_check_branch
      %801 = sbr.rel (0) target = $region65
    $region64: #{tpu_custom_call.1} parent=1 // pred_region
      %s803 = ssub.s32 256, 256
      %804 = vsyncadd [#allocation4], %s803
      %s805 = sshll.u32 [#allocation11], 4
      %s806 = int_to_ptr.vmem [resolvable:$true] %s805
      %811 = dma.vmem_to_hbm [thread:$0]  %s806, 256, %s10, [#allocation4], 128, 128, 8
    $region65: #{tpu_custom_call.1} parent=1 // pred_fallthru
      _
    // Predicated region
    $region66: #{tpu_custom_call.1} parent=1 // pred_check
      _
    $region67: #{tpu_custom_call.1} parent=1 // pred_check_branch
      %813 = sbr.rel (0) target = $region69
    $region68: #{tpu_custom_call.1} parent=1 // pred_region
      %s815 = ssub.s32 256, 256
      %816 = vsyncadd [#allocation13], %s815
      %s817 = sshll.u32 [#allocation12], 4
      %s818 = int_to_ptr.vmem [resolvable:$true] %s817
      %823 = dma.vmem_to_hbm [thread:$0]  %s818, 256, %s11, [#allocation13], 128, 128, 8
    $region69: #{tpu_custom_call.1} parent=1 // pred_fallthru
      _
    // Predicated region
    $region70: #{tpu_custom_call.1} parent=1 // pred_check
      _
    $region71: #{tpu_custom_call.1} parent=1 // pred_check_branch
      %825 = sbr.rel (0) target = $region73
    $region72: #{tpu_custom_call.1} parent=1 // pred_region
      %826 = dma.done [#allocation4], 256
    $region73: #{tpu_custom_call.1} parent=1 // pred_fallthru
      _
    // Predicated region
    $region74: #{tpu_custom_call.1} parent=1 // pred_check
      _
    $region75: #{tpu_custom_call.1} parent=1 // pred_check_branch
      %828 = sbr.rel (0) target = $region77
    $region76: #{tpu_custom_call.1} parent=1 // pred_region
      %829 = dma.done [#allocation13], 256
    $region77: #{tpu_custom_call.1} parent=1 // pred_fallthru
      _
    %830 = vsyncpa [#allocation3], 1
    %831 = vsyncpa [#allocation6], 1
    %832 = vsyncpa [#allocation9], 1
    %833 = vsyncpa [#allocation4], 1
    %834 = vsyncpa [#allocation13], 1

</llo_original>
